<compile_context>
chip_gen: v5e
topology: v5e:2x2
jax: 0.10.0
libtpu: 0.0.40
codegen_flags: <defaults>
</compile_context>

<pallas_src>
import functools
import math

import jax
import jax.numpy as jnp
from jax.experimental import pallas as pl
from jax.experimental.pallas import tpu as pltpu

LOG_STD_MAX = 0.0
LOG_STD_MIN = -3.0
HIDDEN = 128


def _round_up(n, m):
    return ((n + m - 1) // m) * m


def policy_kernel(x_ref, w1_ref, b1_ref, wh_ref, bh_ref, out_ref):
    """One batch tile of the SAC policy forward.

    x_ref  : [TB, S]        bf16   input states
    w1_ref : [S, HIDDEN]    bf16
    b1_ref : [1, HIDDEN]    f32
    wh_ref : [HIDDEN, 3*A]  bf16   fused mean|logstd|pi_d head weights
    bh_ref : [1, 3*A]       f32    fused head biases
    out_ref: [TB, 3*A]      f32    fused mean|log_std|pi_d (lane-contiguous)
    """
    x = x_ref[...]

    # fc1 + relu  (bf16 MXU matmul, f32 accumulate; epilogue in f32)
    h = jnp.dot(x, w1_ref[...], preferred_element_type=jnp.float32) + b1_ref[...]
    h = jnp.maximum(h, 0.0)

    # single fused head matmul (replaces three dot+bias blocks)
    z = jnp.dot(h.astype(wh_ref.dtype), wh_ref[...],
                preferred_element_type=jnp.float32) + bh_ref[...]

    a = out_ref.shape[-1] // 3
    lane = jax.lax.broadcasted_iota(jnp.int32, z.shape, 1)

    # tanh over the whole fused tile (EUP slot is free filler); per-lane select:
    #   lanes [0, A)   -> mean    = tanh(z)
    #   lanes [A, 2A)  -> log_std = affine-squash(tanh(z))
    #   lanes [2A, 3A) -> pi_d    = z (raw logits)
    t = jnp.tanh(z)
    squashed = LOG_STD_MIN + 0.5 * (LOG_STD_MAX - LOG_STD_MIN) * (t + 1.0)
    out = jnp.where(lane < a, t, jnp.where(lane < 2 * a, squashed, z))
    out_ref[...] = out.astype(out_ref.dtype)


def policy_forward(x, params, *, batch_tile=256, mxu_dtype=jnp.bfloat16):
    """x: [B, state_size] f32.  params: dict of per-layer (W, b).

    Returns (mean, log_std, pi_d), each [B, action_size] f32.
    """
    B, S = x.shape
    A = params["wm"].shape[1]

    # ---- wrapper-side fusion & dtype plumbing (layout work, not compute) ----
    w1 = params["w1"].astype(mxu_dtype)
    b1 = params["b1"].astype(jnp.float32)
    wh = jnp.concatenate([params["wm"], params["wl"], params["wp"]],
                         axis=1).astype(mxu_dtype)          # [HIDDEN, 3*A]
    bh = jnp.concatenate([params["bm"], params["bl"], params["bp"]],
                         axis=1).astype(jnp.float32)         # [1, 3*A]
    x_lp = x.astype(mxu_dtype)

    # ---- batch tiling: pad B to a multiple of the tile, grid over tiles ----
    tb = min(batch_tile, _round_up(B, 8))
    b_pad = _round_up(B, tb)
    if b_pad != B:
        x_lp = jnp.pad(x_lp, ((0, b_pad - B), (0, 0)))

    out = pl.pallas_call(
        policy_kernel,
        out_shape=jax.ShapeDtypeStruct((b_pad, 3 * A), jnp.float32),
        grid_spec=pltpu.PrefetchScalarGridSpec(
            num_scalar_prefetch=0,
            grid=(b_pad // tb,),
            in_specs=[
                pl.BlockSpec((tb, S), lambda i: (i, 0)),          # x tile
                pl.BlockSpec((S, HIDDEN), lambda i: (0, 0)),      # W1 (resident)
                pl.BlockSpec((1, HIDDEN), lambda i: (0, 0)),      # b1
                pl.BlockSpec((HIDDEN, 3 * A), lambda i: (0, 0)),  # fused heads W
                pl.BlockSpec((1, 3 * A), lambda i: (0, 0)),       # fused heads b
            ],
            out_specs=pl.BlockSpec((tb, 3 * A), lambda i: (i, 0)),
        ),
        compiler_params=pltpu.CompilerParams(
            dimension_semantics=("parallel",),
        ),
    )(x_lp, w1, b1, wh, bh)

    out = out[:B]
    mean = out[:, :A]
    log_std = out[:, A:2 * A]
    pi_d = out[:, 2 * A:]
    return mean, log_std, pi_d


policy_forward_jit = jax.jit(
    functools.partial(policy_forward), static_argnames=())


def init_params(key, state_size, action_size):
    """Deterministic init mimicking nn.Linear's U(-1/sqrt(fan_in), 1/sqrt(fan_in))."""
    def linear(k, fan_in, fan_out):
        kw, kb = jax.random.split(k)
        bound = 1.0 / math.sqrt(fan_in)
        w = jax.random.uniform(kw, (fan_in, fan_out), jnp.float32, -bound, bound)
        b = jax.random.uniform(kb, (1, fan_out), jnp.float32, -bound, bound)
        return w, b

    k1, k2, k3, k4 = jax.random.split(key, 4)
    w1, b1 = linear(k1, state_size, HIDDEN)
    wm, bm = linear(k2, HIDDEN, action_size)
    wl, bl = linear(k3, HIDDEN, action_size)
    wp, bp = linear(k4, HIDDEN, action_size)
    return dict(w1=w1, b1=b1, wm=wm, bm=bm, wl=wl, bl=bl, wp=wp, bp=bp)


def reference_forward_bf16(x, p, mxu_dtype=jnp.bfloat16):
    """Mirrors the kernel's precision path (bf16 MXU operands, f32 accumulate)."""
    xq = x.astype(mxu_dtype)
    h = jnp.maximum(
        jnp.dot(xq, p["w1"].astype(mxu_dtype),
                preferred_element_type=jnp.float32) + p["b1"], 0.0)
    hq = h.astype(mxu_dtype)
    mean = jnp.tanh(jnp.dot(hq, p["wm"].astype(mxu_dtype),
                            preferred_element_type=jnp.float32) + p["bm"])
    ls = jnp.tanh(jnp.dot(hq, p["wl"].astype(mxu_dtype),
                          preferred_element_type=jnp.float32) + p["bl"])
    ls = LOG_STD_MIN + 0.5 * (LOG_STD_MAX - LOG_STD_MIN) * (ls + 1.0)
    pid = jnp.dot(hq, p["wp"].astype(mxu_dtype),
                  preferred_element_type=jnp.float32) + p["bp"]
    return mean, ls, pid


def reference_forward_f32(x, p):
    """Pure-f32 reference matching the PyTorch module semantics exactly."""
    h = jnp.maximum(x @ p["w1"] + p["b1"], 0.0)
    mean = jnp.tanh(h @ p["wm"] + p["bm"])
    ls = jnp.tanh(h @ p["wl"] + p["bl"])
    ls = LOG_STD_MIN + 0.5 * (LOG_STD_MAX - LOG_STD_MIN) * (ls + 1.0)
    pid = h @ p["wp"] + p["bp"]
    return mean, ls, pid


if __name__ == "__main__":
    key = jax.random.PRNGKey(0)
    k_params, k_x = jax.random.split(key)

    batch = 8
    state_size = 32
    action_size = 8

    params = init_params(k_params, state_size, action_size)
    x = jax.random.normal(k_x, (batch, state_size), jnp.float32)

    mean, log_std, pi_d = policy_forward(x, params)
    jax.block_until_ready((mean, log_std, pi_d))

    # 1) precise check against a JAX reference that mirrors the bf16 MXU path
    rm, rl, rp = reference_forward_bf16(x, params)
    assert jnp.allclose(mean, rm, atol=1e-4), "mean mismatch (bf16 path)"
    assert jnp.allclose(log_std, rl, atol=1e-4), "log_std mismatch (bf16 path)"
    assert jnp.allclose(pi_d, rp, atol=1e-4), "pi_d mismatch (bf16 path)"

    # 2) semantic check against the exact f32 PyTorch-equivalent forward
    fm, fl, fp = reference_forward_f32(x, params)
    assert jnp.allclose(mean, fm, atol=5e-2), "mean deviates from f32 semantics"
    assert jnp.allclose(log_std, fl, atol=5e-2), "log_std deviates from f32 semantics"
    assert jnp.allclose(pi_d, fp, atol=5e-2), "pi_d deviates from f32 semantics"

    print("KERNEL_OK")
</pallas_src>

<mosaic_0001>
module attributes {stable_mosaic.version = 11 : i64} {
  func.func @policy_kernel(%arg0: i32, %arg1: memref<8x32xbf16, #tpu.memory_space<vmem>>, %arg2: memref<32x128xbf16, #tpu.memory_space<vmem>>, %arg3: memref<1x128xf32, #tpu.memory_space<vmem>>, %arg4: memref<128x24xbf16, #tpu.memory_space<vmem>>, %arg5: memref<1x24xf32, #tpu.memory_space<vmem>>, %arg6: memref<8x24xf32, #tpu.memory_space<vmem>>) attributes {dimension_semantics = [#tpu.dimension_semantics<parallel>], iteration_bounds = array<i64: 1>, scalar_prefetch = 0 : i64, scratch_operands = 0 : i64, tpu.core_type = #tpu.core_type<tc>, window_params = [{transform_indices = @transform_0, window_bounds = array<i64: 8, 32>}, {pipeline_mode = #tpu.pipeline_mode<synchronous>, transform_indices = @transform_1, window_bounds = array<i64: 32, 128>}, {pipeline_mode = #tpu.pipeline_mode<synchronous>, transform_indices = @transform_2, window_bounds = array<i64: 1, 128>}, {pipeline_mode = #tpu.pipeline_mode<synchronous>, transform_indices = @transform_3, window_bounds = array<i64: 128, 24>}, {pipeline_mode = #tpu.pipeline_mode<synchronous>, transform_indices = @transform_4, window_bounds = array<i64: 1, 24>}, {transform_indices = @transform_5, window_bounds = array<i64: 8, 24>}]} {
    %c0 = arith.constant 0 : index
    %c0_0 = arith.constant 0 : index
    %0 = vector.load %arg1[%c0, %c0_0] : memref<8x32xbf16, #tpu.memory_space<vmem>>, vector<8x32xbf16>
    %c0_1 = arith.constant 0 : index
    %c0_2 = arith.constant 0 : index
    %1 = vector.load %arg2[%c0_1, %c0_2] : memref<32x128xbf16, #tpu.memory_space<vmem>>, vector<32x128xbf16>
    %cst = arith.constant dense<0.000000e+00> : vector<8x128xf32>
    %2 = tpu.matmul %0, %1, %cst {dimension_numbers = #tpu.dot_dimension_numbers<[1], [0], [0], [1], [0, 0, 1, 1], [], []>} : vector<8x32xbf16>, vector<32x128xbf16>, vector<8x128xf32> -> vector<8x128xf32>
    %c0_3 = arith.constant 0 : index
    %c0_4 = arith.constant 0 : index
    %3 = vector.load %arg3[%c0_3, %c0_4] : memref<1x128xf32, #tpu.memory_space<vmem>>, vector<1x128xf32>
    %4 = vector.broadcast %3 : vector<1x128xf32> to vector<8x128xf32>
    %5 = arith.addf %2, %4 : vector<8x128xf32>
    %cst_5 = arith.constant 0.000000e+00 : f32
    %6 = vector.broadcast %cst_5 : f32 to vector<8x128xf32>
    %7 = arith.maximumf %5, %6 : vector<8x128xf32>
    %8 = arith.truncf %7 : vector<8x128xf32> to vector<8x128xbf16>
    %c0_6 = arith.constant 0 : index
    %c0_7 = arith.constant 0 : index
    %9 = vector.load %arg4[%c0_6, %c0_7] : memref<128x24xbf16, #tpu.memory_space<vmem>>, vector<128x24xbf16>
    %cst_8 = arith.constant dense<0.000000e+00> : vector<8x24xf32>
    %10 = tpu.matmul %8, %9, %cst_8 {dimension_numbers = #tpu.dot_dimension_numbers<[1], [0], [0], [1], [0, 0, 1, 1], [], []>} : vector<8x128xbf16>, vector<128x24xbf16>, vector<8x24xf32> -> vector<8x24xf32>
    %c0_9 = arith.constant 0 : index
    %c0_10 = arith.constant 0 : index
    %11 = vector.load %arg5[%c0_9, %c0_10] : memref<1x24xf32, #tpu.memory_space<vmem>>, vector<1x24xf32>
    %12 = vector.broadcast %11 : vector<1x24xf32> to vector<8x24xf32>
    %13 = arith.addf %10, %12 : vector<8x24xf32>
    %14 = tpu.iota {dimensions = array<i32: 1>} : vector<8x24xi32>
    %15 = math.tanh %13 : vector<8x24xf32>
    %cst_11 = arith.constant 1.000000e+00 : f32
    %16 = vector.broadcast %cst_11 : f32 to vector<8x24xf32>
    %17 = arith.addf %15, %16 : vector<8x24xf32>
    %cst_12 = arith.constant 1.500000e+00 : f32
    %18 = vector.broadcast %cst_12 : f32 to vector<8x24xf32>
    %19 = arith.mulf %18, %17 : vector<8x24xf32>
    %cst_13 = arith.constant -3.000000e+00 : f32
    %20 = vector.broadcast %cst_13 : f32 to vector<8x24xf32>
    %21 = arith.addf %20, %19 : vector<8x24xf32>
    %c8_i32 = arith.constant 8 : i32
    %22 = vector.broadcast %c8_i32 : i32 to vector<8x24xi32>
    %23 = arith.cmpi slt, %14, %22 : vector<8x24xi32>
    %c16_i32 = arith.constant 16 : i32
    %24 = vector.broadcast %c16_i32 : i32 to vector<8x24xi32>
    %25 = arith.cmpi slt, %14, %24 : vector<8x24xi32>
    %26 = arith.select %25, %21, %13 : vector<8x24xi1>, vector<8x24xf32>
    %27 = arith.select %23, %15, %26 : vector<8x24xi1>, vector<8x24xf32>
    %c0_14 = arith.constant 0 : index
    %c0_15 = arith.constant 0 : index
    %28 = vector.load %arg6[%c0_14, %c0_15] : memref<8x24xf32, #tpu.memory_space<vmem>>, vector<8x24xf32>
    tpu.vector_store %arg6[%c0_14, %c0_15], %27 {strides = array<i32>} : memref<8x24xf32, #tpu.memory_space<vmem>>, vector<8x24xf32>,
    return
  }
  func.func @transform_0(%arg0: i32) -> (i32, i32) {
    %c0_i32 = arith.constant 0 : i32
    %c0_i32_0 = arith.constant 0 : i32
    return %arg0, %c0_i32 : i32, i32
  }
  func.func @transform_1(%arg0: i32) -> (i32, i32) {
    %c0_i32 = arith.constant 0 : i32
    %c0_i32_0 = arith.constant 0 : i32
    %c0_i32_1 = arith.constant 0 : i32
    return %c0_i32, %c0_i32_0 : i32, i32
  }
  func.func @transform_2(%arg0: i32) -> (i32, i32) {
    %c0_i32 = arith.constant 0 : i32
    %c0_i32_0 = arith.constant 0 : i32
    %c0_i32_1 = arith.constant 0 : i32
    return %c0_i32, %c0_i32_0 : i32, i32
  }
  func.func @transform_3(%arg0: i32) -> (i32, i32) {
    %c0_i32 = arith.constant 0 : i32
    %c0_i32_0 = arith.constant 0 : i32
    %c0_i32_1 = arith.constant 0 : i32
    return %c0_i32, %c0_i32_0 : i32, i32
  }
  func.func @transform_4(%arg0: i32) -> (i32, i32) {
    %c0_i32 = arith.constant 0 : i32
    %c0_i32_0 = arith.constant 0 : i32
    %c0_i32_1 = arith.constant 0 : i32
    return %c0_i32, %c0_i32_0 : i32, i32
  }
  func.func @transform_5(%arg0: i32) -> (i32, i32) {
    %c0_i32 = arith.constant 0 : i32
    %c0_i32_0 = arith.constant 0 : i32
    return %arg0, %c0_i32 : i32, i32
  }
}

</mosaic_0001>

<llo_original>
// kernel: tpu_custom_call.1
$region0: #{tpu_custom_call.1}
  #allocation0 [shape = 'u32[]', space=smem, size = 0x4, offset = 0x4, fixed_abs, tag = 'smem constant byte address 0x4 - core index']
  #allocation1 [shape = 'u32[72,128]{1,0:T(1,128)}', space=vmem, size = 0x9000, scoped, tag = 'internal scratch']
  %s0 = inlined_call_operand.vmem [shape: bf16[8,32], index: 0, kind: input, shape index: {}]
  %s1 = inlined_call_operand.vmem [shape: bf16[32,128], index: 1, kind: input, shape index: {}]
  %s2 = inlined_call_operand.vmem [shape: f32[1,128], index: 2, kind: input, shape index: {}]
  %s3 = inlined_call_operand.vmem [shape: bf16[128,24], index: 3, kind: input, shape index: {}]
  %s4 = inlined_call_operand.vmem [shape: f32[1,24], index: 4, kind: input, shape index: {}]
  %s5 = inlined_call_operand.hbm [shape: f32[8,24], index: 5, kind: output, shape index: {}]
  %s6 = sld [smem:[#allocation0]]
  $region30: #{tpu_custom_call.1} parent=0
    _
  %s8 = ssub.s32 1, %s6
  %s9 = scalar_select 0, %s8, %s6
  $region1: #{tpu_custom_call.1} parent=0
    #allocation2 [shape = 'u8[4096]{0}', space=vmem, size = 0x1000, scoped, tag = 'output window, operand 0, single buffered']
    #allocation3 [shape = 's32[1]{0}', space=sflag, size = 0x4, scoped, tag = 'scoped memory for tpu_custom_call.1']
    %10 = vsyncpa [#allocation3], 0
    // Predicated region
    $region2: #{tpu_custom_call.1} parent=1 // pred_check
      _
    $region3: #{tpu_custom_call.1} parent=1 // pred_check_branch
      %12 = sbr.rel (0) target = $region5
    $region4: #{tpu_custom_call.1} parent=1 // pred_region
      _
    $region5: #{tpu_custom_call.1} parent=1 // pred_fallthru
      _
    // Predicated region
    $region6: #{tpu_custom_call.1} parent=1 // pred_check
      _
    $region7: #{tpu_custom_call.1} parent=1 // pred_check_branch
      %14 = sbr.rel (0) target = $region9
    $region8: #{tpu_custom_call.1} parent=1 // pred_region
      _
    $region9: #{tpu_custom_call.1} parent=1 // pred_fallthru
      _
    // Predicated region
    $region10: #{tpu_custom_call.1} parent=1 // pred_check
      _
    $region11: #{tpu_custom_call.1} parent=1 // pred_check_branch
      %16 = sbr.rel (0) target = $region13
    $region12: #{tpu_custom_call.1} parent=1 // pred_region
      _
    $region13: #{tpu_custom_call.1} parent=1 // pred_fallthru
      _
    // Predicated region
    $region14: #{tpu_custom_call.1} parent=1 // pred_check
      _
    $region15: #{tpu_custom_call.1} parent=1 // pred_check_branch
      %18 = sbr.rel (0) target = $region17
    $region16: #{tpu_custom_call.1} parent=1 // pred_region
      _
    $region17: #{tpu_custom_call.1} parent=1 // pred_fallthru
      _
    // Predicated region
    $region18: #{tpu_custom_call.1} parent=1 // pred_check
      _
    $region19: #{tpu_custom_call.1} parent=1 // pred_check_branch
      %20 = sbr.rel (0) target = $region21
    $region20: #{tpu_custom_call.1} parent=1 // pred_region
      _
    $region21: #{tpu_custom_call.1} parent=1 // pred_fallthru
      _
    %v22 = vld [vmem:[%s0] sm:$0xf]
    %v23 = vld [vmem:[%s1] sm:$0xf]
    %v24 = vld [vmem:[%s1 + $0x4] sm:$0xf]
    %v25 = vld [vmem:[%s1 + $0x8] sm:$0xf]
    %v26 = vld [vmem:[%s1 + $0xc] sm:$0xf]
    %v27 = vld [vmem:[%s2] sm:$0x1]
    %v29 = vperm.slane %v27, 0
    %v35 = vunpack.c.l.b16 %v23
    %v36 = vunpack.c.l.b16 %v24
    %v37 = vunpack.c.l.b16 %v25
    %v38 = vunpack.c.l.b16 %v26
    %v39 = vpack.c.b16 %v36, %v35
    %v40 = vpack.c.b16 %v38, %v37
    %vm43 = vcmask 261120
    %v45 = vsel %vm43, %v22, 0
    %47 = vmatpush.bf16.msra.mxu0 0
    %48 = vmatpush.bf16.msra.mxu0 0
    %49 = vmatpush.bf16.msra.mxu0 0
    %50 = vmatpush.bf16.msra.mxu0 0
    %51 = vmatpush.bf16.msra.mxu0 0
    %52 = vmatpush.bf16.msra.mxu0 0
    %53 = vmatpush.bf16.msra.mxu0 %v40
    %54 = vmatpush.bf16.msra.mxu0 %v39
    %55 = vmatmul.bf16.gmra.mxu0 %v45
    %v56 = vpop.f32.mrf.mxu0
    %v57 = vadd.f32 %v29, %v56
    %v58 = vpop.f32.mrf.mxu0
    %59 = vdwg.mxu0
    %v60 = vmax.f32 %v57, 0.0
    %v61 = vpack.c.bf16 %v60, %v60
    %v62 = vld [vmem:[%s3] sm:$0xf]
    %v63 = vld [vmem:[%s3 + $0x4] sm:$0xf]
    %v64 = vld [vmem:[%s3 + $0x8] sm:$0xf]
    %v65 = vld [vmem:[%s3 + $0xc] sm:$0xf]
    %v66 = vld [vmem:[%s3 + $0x10] sm:$0xf]
    %v67 = vld [vmem:[%s3 + $0x14] sm:$0xf]
    %v68 = vld [vmem:[%s3 + $0x18] sm:$0xf]
    %v69 = vld [vmem:[%s3 + $0x1c] sm:$0xf]
    %v70 = vld [vmem:[%s3 + $0x20] sm:$0xf]
    %v71 = vld [vmem:[%s3 + $0x24] sm:$0xf]
    %v72 = vld [vmem:[%s3 + $0x28] sm:$0xf]
    %v73 = vld [vmem:[%s3 + $0x2c] sm:$0xf]
    %v74 = vld [vmem:[%s3 + $0x30] sm:$0xf]
    %v75 = vld [vmem:[%s3 + $0x34] sm:$0xf]
    %v76 = vld [vmem:[%s3 + $0x38] sm:$0xf]
    %v77 = vld [vmem:[%s3 + $0x3c] sm:$0xf]
    %v78 = vld [vmem:[%s4] sm:$0x1]
    %v80 = vperm.slane %v78, 0
    %v98 = vunpack.c.l.b16 %v62
    %v99 = vunpack.c.l.b16 %v63
    %v100 = vunpack.c.l.b16 %v64
    %v101 = vunpack.c.l.b16 %v65
    %v102 = vunpack.c.l.b16 %v66
    %v103 = vunpack.c.l.b16 %v67
    %v104 = vunpack.c.l.b16 %v68
    %v105 = vunpack.c.l.b16 %v69
    %v106 = vunpack.c.l.b16 %v70
    %v107 = vunpack.c.l.b16 %v71
    %v108 = vunpack.c.l.b16 %v72
    %v109 = vunpack.c.l.b16 %v73
    %v110 = vunpack.c.l.b16 %v74
    %v111 = vunpack.c.l.b16 %v75
    %v112 = vunpack.c.l.b16 %v76
    %v113 = vunpack.c.l.b16 %v77
    %v114 = vpack.c.b16 %v99, %v98
    %v115 = vpack.c.b16 %v101, %v100
    %v116 = vpack.c.b16 %v103, %v102
    %v117 = vpack.c.b16 %v105, %v104
    %v118 = vpack.c.b16 %v107, %v106
    %v119 = vpack.c.b16 %v109, %v108
    %v120 = vpack.c.b16 %v111, %v110
    %v121 = vpack.c.b16 %v113, %v112
    %130 = vmatpush.bf16.msra.mxu0 %v121
    %131 = vmatpush.bf16.msra.mxu0 %v120
    %132 = vmatpush.bf16.msra.mxu0 %v119
    %133 = vmatpush.bf16.msra.mxu0 %v118
    %134 = vmatpush.bf16.msra.mxu0 %v117
    %135 = vmatpush.bf16.msra.mxu0 %v116
    %136 = vmatpush.bf16.msra.mxu0 %v115
    %137 = vmatpush.bf16.msra.mxu0 %v114
    %138 = vmatmul.bf16.gmra.mxu0 %v61
    %v139 = vpop.f32.mrf.mxu0
    %v140 = vadd.f32 %v80, %v139
    %v141 = vpop.f32.mrf.mxu0
    %142 = vdwg.mxu0
    %v143 = vlaneseq
    %v144 = vand.u32 %v143, 127
    %v145 = vtanh.pop %v140
    %v146 = vadd.f32 %v145, 1.0
    %v147 = vmul.f32 %v146, 1.5
    %v148 = vadd.f32 %v147, -3.0
    %vm149 = vcmp.lt.s32.totalorder %v144, 8
    %vm150 = vcmp.lt.s32.totalorder %v144, 16
    %v151 = vsel %vm150, %v148, %v140
    %v152 = vsel %vm149, %v145, %v151
    %vm153 = vcmask 195584
    %154 = vst.msk [vmem:[#allocation2] sm:$0xff] %vm153, %v152
    // Predicated region
    $region22: #{tpu_custom_call.1} parent=1 // pred_check
      _
    $region23: #{tpu_custom_call.1} parent=1 // pred_check_branch
      %156 = sbr.rel (0) target = $region25
    $region24: #{tpu_custom_call.1} parent=1 // pred_region
      %158 = vsyncadd [#allocation3], 0
      %s160 = sshll.u32 [#allocation2], 4
      %s161 = int_to_ptr.vmem [resolvable:$true] %s160
      %s162 = sshll.u32 %s5, 4
      %s163 = int_to_ptr.hbm [resolvable:$true] %s162
      %165 = dma.vmem_to_hbm [thread:$0]  %s161, 128, %s163, [#allocation3]
    $region25: #{tpu_custom_call.1} parent=1 // pred_fallthru
      _
    // Predicated region
    $region26: #{tpu_custom_call.1} parent=1 // pred_check
      _
    $region27: #{tpu_custom_call.1} parent=1 // pred_check_branch
      %167 = sbr.rel (0) target = $region29
    $region28: #{tpu_custom_call.1} parent=1 // pred_region
      %169 = dma.done [#allocation3], 128
    $region29: #{tpu_custom_call.1} parent=1 // pred_fallthru
      _
    %170 = vsyncpa [#allocation3], 1

</llo_original>
